<compile_context>
chip_gen: v6e
topology: v6e:2x2x1
jax: 0.10.0
libtpu: 0.0.40
codegen_flags: <defaults>
</compile_context>

<pallas_src>
import jax
import jax.numpy as jnp
from jax import lax
from jax.experimental import pallas as pl
from jax.experimental.pallas import tpu as pltpu

EPS = 1e-5  # torch.nn.InstanceNorm1d default eps


def _round_up(n, m):
    return ((n + m - 1) // m) * m


def _cdiv(a, b):
    return (a + b - 1) // b


def suppress_kernel(x_ref, w1_ref, b1_ref, w2_ref, b2_ref, o_ref):
    # x_ref : (S, TN)   columns = (b, c) instances, rows = segment axis
    # w1_ref: (E, S)    (PyTorch nn.Linear weight, used as-is: h = W1 @ xn)
    # b1_ref: (E, 1)
    # w2_ref: (E, 1)
    # b2_ref: (1, 1)    SMEM scalar
    # o_ref : (1, TN)   lane-dense output tile
    x = x_ref[...].astype(jnp.float32)

    # InstanceNorm1d (affine=False): per-instance mean / biased variance over S.
    # Two-pass variance: numerically robust for |mean| >> std inputs.
    mean = jnp.mean(x, axis=0, keepdims=True)               # (1, TN)
    xc = x - mean                                           # (S, TN)
    var = jnp.mean(xc * xc, axis=0, keepdims=True)          # (1, TN)
    xn = xc * lax.rsqrt(var + EPS)                          # (S, TN)

    # mlp1 + ReLU on the MXU: (E, S) @ (S, TN) -> (E, TN), f32 accumulation.
    h = jnp.dot(w1_ref[...], xn, preferred_element_type=jnp.float32) + b1_ref[...]
    h = jnp.maximum(h, 0.0)                                 # (E, TN)

    # mlp2 (output width 1) off the MXU: VPU broadcast-mul + sublane reduce.
    logit = jnp.sum(h * w2_ref[...], axis=0, keepdims=True) + b2_ref[0, 0]  # (1, TN)

    o_ref[...] = jax.nn.sigmoid(logit)                      # lane-dense store


def suppress_net_forward(x, w1, b1, w2, b2, *, tile_n=32768,
                         activation_dtype=jnp.float32):
    """x: (B, S, C) float32 (PyTorch input convention). Returns (B, C) float32.

    w1: (2S, S), b1: (2S,), w2: (1, 2S), b2: (1,)  -- PyTorch nn.Linear layout.
    tile_n: instance-axis tile (columns). Default 32768 (~2 MiB x tile at S=16);
            use ~16384 on v5e if VMEM-constrained.
    activation_dtype: dtype of the lane-major activation slab (bf16 halves the
            dominant HBM read at a small accuracy cost; stats/matmul stay f32).
    """
    B, S, C = x.shape
    E = w1.shape[0]  # 2 * S
    N = B * C

    # Lane-major layout: (B, S, C) -> (S, B*C); column n = b*C + c.
    xt = jnp.transpose(x, (1, 0, 2)).reshape(S, N).astype(activation_dtype)

    # Pad only to lane alignment (128); ragged last tile overhangs the array.
    Npad = _round_up(N, 128)
    if Npad != N:
        xt = jnp.pad(xt, ((0, 0), (0, Npad - N)))

    TN = min(int(tile_n), Npad)
    TN = _round_up(max(TN, 128), 128)
    # Ensure >=2 grid steps for sizeable N so the "parallel" axis can shard
    # across both TensorCores on v7x.
    if Npad > 4096 and _cdiv(Npad, TN) < 2:
        TN = _round_up(_cdiv(Npad, 2), 128)
    grid_n = _cdiv(Npad, TN)

    w1f = w1.astype(jnp.float32)                 # (E, S)
    b1c = b1.reshape(E, 1).astype(jnp.float32)   # (E, 1)
    w2c = w2.reshape(E, 1).astype(jnp.float32)   # (E, 1)
    b2s = b2.reshape(1, 1).astype(jnp.float32)   # (1, 1) -> SMEM scalar

    act_bytes = jnp.dtype(activation_dtype).itemsize
    cost = pl.CostEstimate(
        flops=int(Npad * (2 * E * S + 6 * S + 3 * E)),
        transcendentals=int(3 * Npad),  # rsqrt + sigmoid(exp, recip) per column
        bytes_accessed=int(act_bytes * S * Npad
                           + 4 * (Npad + E * S + 2 * E + 1)),
    )

    out = pl.pallas_call(
        suppress_kernel,
        out_shape=jax.ShapeDtypeStruct((1, Npad), jnp.float32),
        grid=(grid_n,),
        in_specs=[
            pl.BlockSpec((S, TN), lambda i: (0, i)),            # x tile (pipelined)
            pl.BlockSpec((E, S), lambda i: (0, 0)),             # w1 (VMEM-resident)
            pl.BlockSpec((E, 1), lambda i: (0, 0)),             # b1 (VMEM-resident)
            pl.BlockSpec((E, 1), lambda i: (0, 0)),             # w2 (VMEM-resident)
            pl.BlockSpec(memory_space=pltpu.MemorySpace.SMEM),  # b2 scalar
        ],
        out_specs=pl.BlockSpec((1, TN), lambda i: (0, i)),
        compiler_params=pltpu.CompilerParams(
            dimension_semantics=("parallel",),
            vmem_limit_bytes=32 * 1024 * 1024,
        ),
        cost_estimate=cost,
    )(xt, w1f, b1c, w2c, b2s)

    return out[0, :N].reshape(B, C)


def _reference(x, w1, b1, w2, b2):
    """Pure-JAX reference mirroring the PyTorch forward."""
    bx = jnp.transpose(x, (0, 2, 1))                             # (B, C, S)
    mean = jnp.mean(bx, axis=-1, keepdims=True)
    var = jnp.mean(jnp.square(bx - mean), axis=-1, keepdims=True)
    bx = (bx - mean) / jnp.sqrt(var + EPS)
    h = jnp.maximum(bx @ w1.T + b1, 0.0)                         # (B, C, 2S)
    o = jax.nn.sigmoid(h @ w2.T + b2)                            # (B, C, 1)
    return o[..., 0]


if __name__ == "__main__":
    # opt = {'num_of_class': 5, 'segment_size': 16}  -> n_class = 4, S = 16
    S, n_class = 16, 4
    E = 2 * S

    key = jax.random.PRNGKey(0)
    k1, k2, k3, k4, kx1, kx2, kx3 = jax.random.split(key, 7)

    # Deterministic init mimicking nn.Linear defaults: U(-1/sqrt(fan_in), 1/sqrt(fan_in)).
    lim1 = 1.0 / jnp.sqrt(jnp.float32(S))
    lim2 = 1.0 / jnp.sqrt(jnp.float32(E))
    w1 = jax.random.uniform(k1, (E, S), minval=-lim1, maxval=lim1, dtype=jnp.float32)
    b1 = jax.random.uniform(k2, (E,), minval=-lim1, maxval=lim1, dtype=jnp.float32)
    w2 = jax.random.uniform(k3, (1, E), minval=-lim2, maxval=lim2, dtype=jnp.float32)
    b2 = jax.random.uniform(k4, (1,), minval=-lim2, maxval=lim2, dtype=jnp.float32)

    # Case 1: tiny module-default shape (single 128-column tile, grid=(1,)).
    B1 = 2
    x1 = jax.random.normal(kx1, (B1, S, n_class), dtype=jnp.float32)
    out1 = jax.block_until_ready(suppress_net_forward(x1, w1, b1, w2, b2))
    ref1 = _reference(x1, w1, b1, w2, b2)
    assert out1.shape == (B1, n_class)
    assert jnp.allclose(out1, ref1, atol=1e-5, rtol=1e-5)

    # Case 2: multi-tile grid, exact fit (N = 160 -> Npad = 256, TN = 128, grid=(2,)).
    B2 = 40
    x2 = jax.random.normal(kx2, (B2, S, n_class), dtype=jnp.float32)
    out2 = jax.block_until_ready(suppress_net_forward(x2, w1, b1, w2, b2, tile_n=128))
    ref2 = _reference(x2, w1, b1, w2, b2)
    assert out2.shape == (B2, n_class)
    assert jnp.allclose(out2, ref2, atol=1e-5, rtol=1e-5)

    # Case 3: ragged last tile (N = 288 -> Npad = 384, TN = 256, grid=(2,),
    # last block overhangs the array; masked writes, padded lanes sliced off).
    B3 = 72
    x3 = jax.random.normal(kx3, (B3, S, n_class), dtype=jnp.float32) * 3.0 + 5.0
    out3 = jax.block_until_ready(suppress_net_forward(x3, w1, b1, w2, b2, tile_n=256))
    ref3 = _reference(x3, w1, b1, w2, b2)
    assert out3.shape == (B3, n_class)
    assert jnp.allclose(out3, ref3, atol=1e-5, rtol=1e-5)

    print("KERNEL_OK")
</pallas_src>

<mosaic_0001>
module attributes {stable_mosaic.version = 11 : i64} {
  func.func @suppress_kernel(%arg0: i32, %arg1: memref<16x128xf32, #tpu.memory_space<vmem>>, %arg2: memref<32x16xf32, #tpu.memory_space<vmem>>, %arg3: memref<32x1xf32, #tpu.memory_space<vmem>>, %arg4: memref<32x1xf32, #tpu.memory_space<vmem>>, %arg5: memref<1x1xf32, #tpu.memory_space<smem>>, %arg6: memref<1x128xf32, #tpu.memory_space<vmem>>) attributes {dimension_semantics = [#tpu.dimension_semantics<parallel>], iteration_bounds = array<i64: 1>, scalar_prefetch = 0 : i64, scratch_operands = 0 : i64, tpu.core_type = #tpu.core_type<tc>, window_params = [{transform_indices = @transform_0, window_bounds = array<i64: 16, 128>}, {pipeline_mode = #tpu.pipeline_mode<synchronous>, transform_indices = @transform_1, window_bounds = array<i64: 32, 16>}, {pipeline_mode = #tpu.pipeline_mode<synchronous>, transform_indices = @transform_2, window_bounds = array<i64: 32, 1>}, {pipeline_mode = #tpu.pipeline_mode<synchronous>, transform_indices = @transform_3, window_bounds = array<i64: 32, 1>}, {transform_indices = @transform_4, window_bounds = array<i64: 1, 1>}, {transform_indices = @transform_5, window_bounds = array<i64: 1, 128>}]} {
    %c0 = arith.constant 0 : index
    %c0_0 = arith.constant 0 : index
    %0 = vector.load %arg1[%c0, %c0_0] : memref<16x128xf32, #tpu.memory_space<vmem>>, vector<16x128xf32>
    %cst = arith.constant dense<0.000000e+00> : vector<128xf32>
    %1 = vector.multi_reduction <add>, %0, %cst [0] : vector<16x128xf32> to vector<128xf32>
    %2 = vector.shape_cast %1 : vector<128xf32> to vector<1x128xf32>
    %cst_1 = arith.constant 1.600000e+01 : f32
    %3 = vector.broadcast %cst_1 : f32 to vector<1x128xf32>
    %4 = arith.divf %2, %3 : vector<1x128xf32>
    %5 = vector.broadcast %4 : vector<1x128xf32> to vector<16x128xf32>
    %6 = arith.subf %0, %5 : vector<16x128xf32>
    %7 = arith.mulf %6, %6 : vector<16x128xf32>
    %cst_2 = arith.constant dense<0.000000e+00> : vector<128xf32>
    %8 = vector.multi_reduction <add>, %7, %cst_2 [0] : vector<16x128xf32> to vector<128xf32>
    %9 = vector.shape_cast %8 : vector<128xf32> to vector<1x128xf32>
    %cst_3 = arith.constant 1.600000e+01 : f32
    %10 = vector.broadcast %cst_3 : f32 to vector<1x128xf32>
    %11 = arith.divf %9, %10 : vector<1x128xf32>
    %cst_4 = arith.constant 9.99999974E-6 : f32
    %12 = vector.broadcast %cst_4 : f32 to vector<1x128xf32>
    %13 = arith.addf %11, %12 : vector<1x128xf32>
    %14 = math.rsqrt %13 : vector<1x128xf32>
    %15 = vector.broadcast %14 : vector<1x128xf32> to vector<16x128xf32>
    %16 = arith.mulf %6, %15 : vector<16x128xf32>
    %c0_5 = arith.constant 0 : index
    %c0_6 = arith.constant 0 : index
    %17 = vector.load %arg2[%c0_5, %c0_6] : memref<32x16xf32, #tpu.memory_space<vmem>>, vector<32x16xf32>
    %cst_7 = arith.constant dense<0.000000e+00> : vector<32x128xf32>
    %18 = tpu.matmul %17, %16, %cst_7 {dimension_numbers = #tpu.dot_dimension_numbers<[1], [0], [0], [1], [0, 0, 1, 1], [], []>} : vector<32x16xf32>, vector<16x128xf32>, vector<32x128xf32> -> vector<32x128xf32>
    %c0_8 = arith.constant 0 : index
    %c0_9 = arith.constant 0 : index
    %19 = vector.load %arg3[%c0_8, %c0_9] : memref<32x1xf32, #tpu.memory_space<vmem>>, vector<32x1xf32>
    %20 = vector.broadcast %19 : vector<32x1xf32> to vector<32x128xf32>
    %21 = arith.addf %18, %20 : vector<32x128xf32>
    %cst_10 = arith.constant 0.000000e+00 : f32
    %22 = vector.broadcast %cst_10 : f32 to vector<32x128xf32>
    %23 = arith.maximumf %21, %22 : vector<32x128xf32>
    %c0_11 = arith.constant 0 : index
    %c0_12 = arith.constant 0 : index
    %24 = vector.load %arg4[%c0_11, %c0_12] : memref<32x1xf32, #tpu.memory_space<vmem>>, vector<32x1xf32>
    %25 = vector.broadcast %24 : vector<32x1xf32> to vector<32x128xf32>
    %26 = arith.mulf %23, %25 : vector<32x128xf32>
    %cst_13 = arith.constant dense<0.000000e+00> : vector<128xf32>
    %27 = vector.multi_reduction <add>, %26, %cst_13 [0] : vector<32x128xf32> to vector<128xf32>
    %28 = vector.shape_cast %27 : vector<128xf32> to vector<1x128xf32>
    %c0_14 = arith.constant 0 : index
    %c0_15 = arith.constant 0 : index
    %29 = memref.load %arg5[%c0_14, %c0_15] : memref<1x1xf32, #tpu.memory_space<smem>>
    %30 = vector.broadcast %29 : f32 to vector<1x128xf32>
    %31 = arith.addf %28, %30 : vector<1x128xf32>
    %32 = arith.negf %31 : vector<1x128xf32>
    %33 = math.exp %32 : vector<1x128xf32>
    %cst_16 = arith.constant 1.000000e+00 : f32
    %34 = vector.broadcast %cst_16 : f32 to vector<1x128xf32>
    %35 = arith.addf %34, %33 : vector<1x128xf32>
    %36 = arith.divf %34, %35 : vector<1x128xf32>
    %c0_17 = arith.constant 0 : index
    %c0_18 = arith.constant 0 : index
    %37 = vector.load %arg6[%c0_17, %c0_18] : memref<1x128xf32, #tpu.memory_space<vmem>>, vector<1x128xf32>
    tpu.vector_store %arg6[%c0_17, %c0_18], %36 {strides = array<i32>} : memref<1x128xf32, #tpu.memory_space<vmem>>, vector<1x128xf32>,
    return
  }
  func.func @transform_0(%arg0: i32) -> (i32, i32) {
    %c0_i32 = arith.constant 0 : i32
    %c0_i32_0 = arith.constant 0 : i32
    return %c0_i32, %arg0 : i32, i32
  }
  func.func @transform_1(%arg0: i32) -> (i32, i32) {
    %c0_i32 = arith.constant 0 : i32
    %c0_i32_0 = arith.constant 0 : i32
    %c0_i32_1 = arith.constant 0 : i32
    return %c0_i32, %c0_i32_0 : i32, i32
  }
  func.func @transform_2(%arg0: i32) -> (i32, i32) {
    %c0_i32 = arith.constant 0 : i32
    %c0_i32_0 = arith.constant 0 : i32
    %c0_i32_1 = arith.constant 0 : i32
    return %c0_i32, %c0_i32_0 : i32, i32
  }
  func.func @transform_3(%arg0: i32) -> (i32, i32) {
    %c0_i32 = arith.constant 0 : i32
    %c0_i32_0 = arith.constant 0 : i32
    %c0_i32_1 = arith.constant 0 : i32
    return %c0_i32, %c0_i32_0 : i32, i32
  }
  func.func @transform_4(%arg0: i32) -> (i32, i32) {
    %c0_i32 = arith.constant 0 : i32
    %c0_i32_0 = arith.constant 0 : i32
    %c0_i32_1 = arith.constant 0 : i32
    return %c0_i32, %c0_i32_0 : i32, i32
  }
  func.func @transform_5(%arg0: i32) -> (i32, i32) {
    %c0_i32 = arith.constant 0 : i32
    %c0_i32_0 = arith.constant 0 : i32
    return %c0_i32, %arg0 : i32, i32
  }
}

</mosaic_0001>

<llo_original>
// kernel: tpu_custom_call.1
$region0: #{tpu_custom_call.1}
  #allocation0 [shape = 'u32[]', space=smem, size = 0x4, offset = 0x4, fixed_abs, tag = 'smem constant byte address 0x4 - core index']
  #allocation1 [shape = 'u32[144,128]{1,0:T(1,128)}', space=vmem, size = 0x12000, scoped, tag = 'internal scratch']
  #allocation2 [shape = 'f32[1,1]{1,0:T(1,128)S(6)}', space=smem, size = 0x200, scoped, tag = 'scoped memory for tpu_custom_call.1']
  %s0 = inlined_call_operand.vmem [shape: f32[16,128], index: 0, kind: input, shape index: {}]
  %s1 = inlined_call_operand.vmem [shape: f32[32,16], index: 1, kind: input, shape index: {}]
  %s2 = inlined_call_operand.vmem [shape: f32[32,1], index: 2, kind: input, shape index: {}]
  %s3 = inlined_call_operand.vmem [shape: f32[32,1], index: 3, kind: input, shape index: {}]
  %s4 = inlined_call_operand.<no memory space> [shape: f32[1,1], index: 4, kind: input, shape index: {}]
  %s5 = inlined_call_operand.hbm [shape: f32[1,128], index: 5, kind: output, shape index: {}]
  %s6 = sld [smem:[#allocation0]]
  $region30: #{tpu_custom_call.1} parent=0
    _
  %s8 = ssub.s32 1, %s6
  %s9 = scalar_select 0, %s8, %s6
  %10 = sst [smem:[#allocation2]] %s4
  $region1: #{tpu_custom_call.1} parent=0
    #allocation3 [shape = 'u8[512]{0}', space=vmem, size = 0x400, scoped, tag = 'output window, operand 0, single buffered']
    #allocation4 [shape = 's32[1]{0}', space=sflag, size = 0x4, scoped, tag = 'scoped memory for tpu_custom_call.1']
    %11 = vsyncpa [#allocation4], 0
    // Predicated region
    $region2: #{tpu_custom_call.1} parent=1 // pred_check
      _
    $region3: #{tpu_custom_call.1} parent=1 // pred_check_branch
      %13 = sbr.rel (0) target = $region5
    $region4: #{tpu_custom_call.1} parent=1 // pred_region
      _
    $region5: #{tpu_custom_call.1} parent=1 // pred_fallthru
      _
    // Predicated region
    $region6: #{tpu_custom_call.1} parent=1 // pred_check
      _
    $region7: #{tpu_custom_call.1} parent=1 // pred_check_branch
      %15 = sbr.rel (0) target = $region9
    $region8: #{tpu_custom_call.1} parent=1 // pred_region
      _
    $region9: #{tpu_custom_call.1} parent=1 // pred_fallthru
      _
    // Predicated region
    $region10: #{tpu_custom_call.1} parent=1 // pred_check
      _
    $region11: #{tpu_custom_call.1} parent=1 // pred_check_branch
      %17 = sbr.rel (0) target = $region13
    $region12: #{tpu_custom_call.1} parent=1 // pred_region
      _
    $region13: #{tpu_custom_call.1} parent=1 // pred_fallthru
      _
    // Predicated region
    $region14: #{tpu_custom_call.1} parent=1 // pred_check
      _
    $region15: #{tpu_custom_call.1} parent=1 // pred_check_branch
      %19 = sbr.rel (0) target = $region17
    $region16: #{tpu_custom_call.1} parent=1 // pred_region
      _
    $region17: #{tpu_custom_call.1} parent=1 // pred_fallthru
      _
    // Predicated region
    $region18: #{tpu_custom_call.1} parent=1 // pred_check
      _
    $region19: #{tpu_custom_call.1} parent=1 // pred_check_branch
      %21 = sbr.rel (0) target = $region21
    $region20: #{tpu_custom_call.1} parent=1 // pred_region
      _
    $region21: #{tpu_custom_call.1} parent=1 // pred_fallthru
      _
    %v22 = vld [vmem:[%s0] sm:$0xff]
    %v23 = vld [vmem:[%s0 + $0x8] sm:$0xff]
    %v24 = vadd.f32 %v22, %v23
    %v25 = vrot.slane %v24, 4
    %v26 = vadd.f32 %v24, %v25
    %v27 = vrot.slane %v26, 2
    %v28 = vadd.f32 %v26, %v27
    %v29 = vrot.slane %v28, 1
    %v30 = vadd.f32 %v28, %v29
    %v31 = vrcp.pop 16.0
    %v32 = vmul.f32 %v30, %v31
    %v33 = vsub.f32 %v22, %v32
    %v34 = vsub.f32 %v23, %v32
    %v35 = vmul.f32 %v33, %v33
    %v36 = vmul.f32 %v34, %v34
    %v37 = vadd.f32 %v35, %v36
    %v38 = vrot.slane %v37, 4
    %v39 = vadd.f32 %v37, %v38
    %v40 = vrot.slane %v39, 2
    %v41 = vadd.f32 %v39, %v40
    %v42 = vrot.slane %v41, 1
    %v43 = vadd.f32 %v41, %v42
    %v44 = vmul.f32 %v43, %v31
    %v45 = vadd.f32 %v44, 1e-05
    %v46 = vrsqrt.pop %v45
    %v47 = vmul.f32 %v33, %v46
    %v48 = vmul.f32 %v34, %v46
    %v49 = vld [vmem:[%s1] sm:$0xff]
    %v50 = vld [vmem:[%s1 + $0x8] sm:$0xff]
    %v51 = vld [vmem:[%s1 + $0x10] sm:$0xff]
    %v52 = vld [vmem:[%s1 + $0x18] sm:$0xff]
    %v53 = vld [vmem:[%s2] sm:$0xff]
    %v54 = vld [vmem:[%s2 + $0x8] sm:$0xff]
    %v55 = vld [vmem:[%s2 + $0x10] sm:$0xff]
    %v56 = vld [vmem:[%s2 + $0x18] sm:$0xff]
    %58 = vset.pattern.permute.xlu0 0
    %59 = vperm.xlu0 %58, %v53
    %v60 = vpop.permute.xlu0 %59
    %63 = vset.pattern.permute.xlu0 0
    %64 = vperm.xlu0 %63, %v54
    %v65 = vpop.permute.xlu0 %64
    %68 = vset.pattern.permute.xlu0 0
    %69 = vperm.xlu0 %68, %v55
    %v70 = vpop.permute.xlu0 %69
    %73 = vset.pattern.permute.xlu0 0
    %74 = vperm.xlu0 %73, %v56
    %v75 = vpop.permute.xlu0 %74
    %vm77 = vcmask 130048
    %v79 = vsel %vm77, %v49, 0
    %v82 = vsel %vm77, %v50, 0
    %v85 = vsel %vm77, %v51, 0
    %v88 = vsel %vm77, %v52, 0
    %90 = vmatprep.subr.mxu0 0.0
    %91 = vmatpush1.msra.mxu0 0.0
    %92 = vmatprep.subr.mxu0 0.0
    %93 = vmatpush1.msra.mxu0 0.0
    %94 = vmatprep.subr.mxu0 0.0
    %95 = vmatpush1.msra.mxu0 0.0
    %96 = vmatprep.subr.mxu0 0.0
    %97 = vmatpush1.msra.mxu0 0.0
    %98 = vmatprep.subr.mxu0 0.0
    %99 = vmatpush1.msra.mxu0 0.0
    %100 = vmatprep.subr.mxu0 0.0
    %101 = vmatpush1.msra.mxu0 0.0
    %102 = vmatprep.subr.mxu0 0.0
    %103 = vmatpush1.msra.mxu0 0.0
    %104 = vmatprep.subr.mxu0 0.0
    %105 = vmatpush1.msra.mxu0 0.0
    %106 = vmatprep.subr.mxu0 0.0
    %107 = vmatpush1.msra.mxu0 0.0
    %108 = vmatprep.subr.mxu0 0.0
    %109 = vmatpush1.msra.mxu0 0.0
    %110 = vmatprep.subr.mxu0 0.0
    %111 = vmatpush1.msra.mxu0 0.0
    %112 = vmatprep.subr.mxu0 0.0
    %113 = vmatpush1.msra.mxu0 0.0
    %114 = vmatprep.subr.mxu0 0.0
    %115 = vmatpush1.msra.mxu0 0.0
    %116 = vmatprep.subr.mxu0 0.0
    %117 = vmatpush1.msra.mxu0 0.0
    %118 = vmatprep.subr.mxu0 0.0
    %119 = vmatpush1.msra.mxu0 %v48
    %120 = vmatprep.subr.mxu0 0.0
    %121 = vmatpush1.msra.mxu0 %v47
    %122 = vmatprep.subr.mxu0 0.0
    %123 = vmatpush2.msra.mxu0 0.0
    %124 = vmatprep.subr.mxu0 0.0
    %125 = vmatpush2.msra.mxu0 0.0
    %126 = vmatprep.subr.mxu0 0.0
    %127 = vmatpush2.msra.mxu0 0.0
    %128 = vmatprep.subr.mxu0 0.0
    %129 = vmatpush2.msra.mxu0 0.0
    %130 = vmatprep.subr.mxu0 0.0
    %131 = vmatpush2.msra.mxu0 0.0
    %132 = vmatprep.subr.mxu0 0.0
    %133 = vmatpush2.msra.mxu0 0.0
    %134 = vmatprep.subr.mxu0 0.0
    %135 = vmatpush2.msra.mxu0 0.0
    %136 = vmatprep.subr.mxu0 0.0
    %137 = vmatpush2.msra.mxu0 0.0
    %138 = vmatprep.subr.mxu0 0.0
    %139 = vmatpush2.msra.mxu0 0.0
    %140 = vmatprep.subr.mxu0 0.0
    %141 = vmatpush2.msra.mxu0 0.0
    %142 = vmatprep.subr.mxu0 0.0
    %143 = vmatpush2.msra.mxu0 0.0
    %144 = vmatprep.subr.mxu0 0.0
    %145 = vmatpush2.msra.mxu0 0.0
    %146 = vmatprep.subr.mxu0 0.0
    %147 = vmatpush2.msra.mxu0 0.0
    %148 = vmatprep.subr.mxu0 0.0
    %149 = vmatpush2.msra.mxu0 0.0
    %150 = vmatprep.subr.mxu0 0.0
    %151 = vmatpush2.msra.mxu0 0.0
    %152 = vmatprep.subr.mxu0 0.0
    %153 = vmatpush2.msra.mxu0 0.0
    %154 = vmatprep.mubr.f32.mxu0 0.0
    %155 = vmatmul.mubr.f32.gmra.mxu0 %v79
    %v156 = vpop.f32.mrf.mxu0
    %v157 = vadd.f32 %v60, %v156
    %v158 = vpop.f32.mrf.mxu0
    %159 = vmatprep.mubr.f32.mxu0 0.0
    %160 = vmatmul.mubr.f32.gmra.mxu0 %v82
    %v161 = vpop.f32.mrf.mxu0
    %v162 = vadd.f32 %v65, %v161
    %v163 = vpop.f32.mrf.mxu0
    %164 = vmatprep.mubr.f32.mxu0 0.0
    %165 = vmatmul.mubr.f32.gmra.mxu0 %v85
    %v166 = vpop.f32.mrf.mxu0
    %v167 = vadd.f32 %v70, %v166
    %v168 = vpop.f32.mrf.mxu0
    %169 = vmatprep.mubr.f32.mxu0 0.0
    %170 = vmatmul.mubr.f32.gmra.mxu0 %v88
    %v171 = vpop.f32.mrf.mxu0
    %v172 = vadd.f32 %v75, %v171
    %v173 = vpop.f32.mrf.mxu0
    %174 = vdwg.mxu0
    %v175 = vmax.f32 %v157, 0.0
    %v176 = vmax.f32 %v162, 0.0
    %v177 = vmax.f32 %v167, 0.0
    %v178 = vmax.f32 %v172, 0.0
    %v179 = vld [vmem:[%s3] sm:$0xff]
    %v180 = vld [vmem:[%s3 + $0x8] sm:$0xff]
    %v181 = vld [vmem:[%s3 + $0x10] sm:$0xff]
    %v182 = vld [vmem:[%s3 + $0x18] sm:$0xff]
    %184 = vset.pattern.permute.xlu0 0
    %185 = vperm.xlu0 %184, %v179
    %v186 = vpop.permute.xlu0 %185
    %189 = vset.pattern.permute.xlu0 0
    %190 = vperm.xlu0 %189, %v180
    %v191 = vpop.permute.xlu0 %190
    %194 = vset.pattern.permute.xlu0 0
    %195 = vperm.xlu0 %194, %v181
    %v196 = vpop.permute.xlu0 %195
    %199 = vset.pattern.permute.xlu0 0
    %200 = vperm.xlu0 %199, %v182
    %v201 = vpop.permute.xlu0 %200
    %v203 = vmul.f32 %v175, %v186
    %v204 = vmul.f32 %v176, %v191
    %v205 = vmul.f32 %v177, %v196
    %v206 = vmul.f32 %v178, %v201
    %v207 = vadd.f32 %v203, %v204
    %v208 = vadd.f32 %v207, %v205
    %v209 = vadd.f32 %v208, %v206
    %v210 = vrot.slane %v209, 4
    %v211 = vadd.f32 %v209, %v210
    %v212 = vrot.slane %v211, 2
    %v213 = vadd.f32 %v211, %v212
    %v214 = vrot.slane %v213, 1
    %v215 = vadd.f32 %v213, %v214
    %s216 = sld [smem:[#allocation2]]
    %v217 = vstv %s216
    %v218 = vadd.f32 %v215, %v217
    %v219 = vxor.u32 %v218, 2147483648
    %v220 = vmul.f32 %v219, 1.442695
    %v221 = vpow.pop %v220
    %v222 = vadd.f32 %v221, 1.0
    %v223 = vrcp.pop %v222
    %v224 = vmul.f32 1.0, %v223
    %225 = vst [vmem:[#allocation3] sm:$0x1] %v224
    // Predicated region
    $region22: #{tpu_custom_call.1} parent=1 // pred_check
      _
    $region23: #{tpu_custom_call.1} parent=1 // pred_check_branch
      %227 = sbr.rel (0) target = $region25
    $region24: #{tpu_custom_call.1} parent=1 // pred_region
      %s229 = ssub.s32 16, 16
      %230 = vsyncadd [#allocation4], %s229
      %s232 = sshll.u32 [#allocation3], 4
      %s233 = int_to_ptr.vmem [resolvable:$true] %s232
      %235 = dma.vmem_to_hbm [thread:$0]  %s233, 16, %s5, [#allocation4]
    $region25: #{tpu_custom_call.1} parent=1 // pred_fallthru
      _
    // Predicated region
    $region26: #{tpu_custom_call.1} parent=1 // pred_check
      _
    $region27: #{tpu_custom_call.1} parent=1 // pred_check_branch
      %237 = sbr.rel (0) target = $region29
    $region28: #{tpu_custom_call.1} parent=1 // pred_region
      %238 = dma.done [#allocation4], 16
    $region29: #{tpu_custom_call.1} parent=1 // pred_fallthru
      _
    %239 = vsyncpa [#allocation4], 1

</llo_original>
